<compile_context>
chip_gen: v5e
topology: v5e:2x2
jax: 0.10.0
libtpu: 0.0.40
codegen_flags: <defaults>
</compile_context>

<pallas_src>
import jax
import jax.numpy as jnp
import numpy as np
from jax.experimental import pallas as pl
from jax.experimental.pallas import tpu as pltpu


def affine_kernel(p_ref, x_ref, o_ref):
    """y[j, :] = sum_k W[k, j] * x[k, :] + b[j]   (pure VPU FMAs, no MXU).

    p_ref : SMEM f32[in_dim*out_dim + out_dim]  -- folded W (row-major), then b.
    x_ref : VMEM f32[in_dim, TILE_B]            -- batch along the lane axis.
    o_ref : VMEM f32[out_dim, TILE_B]
    """
    in_dim = x_ref.shape[0]
    out_dim = o_ref.shape[0]
    for j in range(out_dim):               # static unroll (out_dim == 1)
        acc = x_ref[0:1, :] * p_ref[0 * out_dim + j]
        for k in range(1, in_dim):         # static unroll (in_dim == 2)
            acc = acc + x_ref[k:k + 1, :] * p_ref[k * out_dim + j]
        bias = p_ref[in_dim * out_dim + j]
        o_ref[j:j + 1, :] = (acc + bias).astype(o_ref.dtype)


def _round_up(n, m):
    return ((n + m - 1) // m) * m


def net_forward(x, w1, b1, w2, b2, *, tile_b=32768):
    """Forward pass of Net: (x @ W1 + b1) @ W2 + b2, apply_activation=False."""
    B, in_dim = x.shape
    hidden = w1.shape[1]
    out_dim = w2.shape[1]

    # Fold the two linear layers into one affine map (valid: no activation
    # between them in the reference module's default configuration).
    w_fold = (w1 @ w2).astype(jnp.float32)                                 # (in_dim, out_dim)
    b_fold = (b1.reshape(1, hidden) @ w2
              + b2.reshape(1, out_dim)).reshape(-1).astype(jnp.float32)    # (out_dim,)
    params = jnp.concatenate([w_fold.reshape(-1), b_fold])                 # 1-D SMEM-friendly

    # Lane-dense layout: batch along the 128-lane axis, padded to the tile.
    lane = 128
    if B <= tile_b:
        b_pad = max(lane, _round_up(B, lane))
        tile = b_pad
    else:
        b_pad = _round_up(B, tile_b)
        tile = tile_b
    x_t = jnp.pad(x.T, ((0, 0), (0, b_pad - B)))                           # (in_dim, b_pad)

    out_t = pl.pallas_call(
        affine_kernel,
        out_shape=jax.ShapeDtypeStruct((out_dim, b_pad), x.dtype),
        grid=(b_pad // tile,),
        in_specs=[
            # Folded parameters: untiled, resident in scalar memory.
            pl.BlockSpec(memory_space=pltpu.MemorySpace.SMEM),
            # Batch tile of the (transposed) input, batch along lanes.
            pl.BlockSpec((in_dim, tile), lambda i: (0, i)),
        ],
        out_specs=pl.BlockSpec((out_dim, tile), lambda i: (0, i)),
        compiler_params=pltpu.CompilerParams(
            dimension_semantics=("parallel",)),
    )(params, x_t)

    # Back to the PyTorch-compatible (B, out_dim) shape.
    return out_t[:, :B].T


def init_params(key, in_dim=2, hidden=32, out_dim=1, dtype=jnp.float32):
    # Deterministic init mimicking PyTorch nn.Linear default:
    # U(-1/sqrt(fan_in), 1/sqrt(fan_in)) for both weight and bias.
    k1, k2, k3, k4 = jax.random.split(key, 4)
    bound1 = 1.0 / np.sqrt(in_dim)
    bound2 = 1.0 / np.sqrt(hidden)
    w1 = jax.random.uniform(k1, (in_dim, hidden), dtype, -bound1, bound1)
    b1 = jax.random.uniform(k2, (1, hidden), dtype, -bound1, bound1)
    w2 = jax.random.uniform(k3, (hidden, out_dim), dtype, -bound2, bound2)
    b2 = jax.random.uniform(k4, (1, out_dim), dtype, -bound2, bound2)
    return w1, b1, w2, b2


if __name__ == "__main__":
    key = jax.random.PRNGKey(0)
    k_x, k_p = jax.random.split(key)

    B, in_dim, hidden, out_dim = 8, 2, 32, 1
    x = jax.random.normal(k_x, (B, in_dim), dtype=jnp.float32)
    w1, b1, w2, b2 = init_params(k_p, in_dim, hidden, out_dim)

    out = net_forward(x, w1, b1, w2, b2)
    out = jax.block_until_ready(out)

    # Sanity check against the unfolded plain-JAX reference of the same math.
    ref = (x @ w1 + b1) @ w2 + b2
    np.testing.assert_allclose(np.asarray(out), np.asarray(ref), rtol=1e-5, atol=1e-5)
    assert out.shape == (B, out_dim)

    print("KERNEL_OK")
</pallas_src>

<mosaic_0001>
module attributes {stable_mosaic.version = 11 : i64} {
  func.func @affine_kernel(%arg0: i32, %arg1: memref<3xf32, #tpu.memory_space<smem>>, %arg2: memref<2x128xf32, #tpu.memory_space<vmem>>, %arg3: memref<1x128xf32, #tpu.memory_space<vmem>>) attributes {dimension_semantics = [#tpu.dimension_semantics<parallel>], iteration_bounds = array<i64: 1>, scalar_prefetch = 0 : i64, scratch_operands = 0 : i64, tpu.core_type = #tpu.core_type<tc>, window_params = [{transform_indices = @transform_0, window_bounds = array<i64: 3>}, {transform_indices = @transform_1, window_bounds = array<i64: 2, 128>}, {transform_indices = @transform_2, window_bounds = array<i64: 1, 128>}]} {
    %c0 = arith.constant 0 : index
    %c0_0 = arith.constant 0 : index
    %0 = vector.load %arg2[%c0, %c0_0] : memref<2x128xf32, #tpu.memory_space<vmem>>, vector<1x128xf32>
    %c0_1 = arith.constant 0 : index
    %1 = memref.load %arg1[%c0_1] : memref<3xf32, #tpu.memory_space<smem>>
    %2 = vector.broadcast %1 : f32 to vector<1x128xf32>
    %3 = arith.mulf %0, %2 : vector<1x128xf32>
    %c1 = arith.constant 1 : index
    %c0_2 = arith.constant 0 : index
    %4 = vector.load %arg2[%c1, %c0_2] : memref<2x128xf32, #tpu.memory_space<vmem>>, vector<1x128xf32>
    %c1_3 = arith.constant 1 : index
    %5 = memref.load %arg1[%c1_3] : memref<3xf32, #tpu.memory_space<smem>>
    %6 = vector.broadcast %5 : f32 to vector<1x128xf32>
    %7 = arith.mulf %4, %6 : vector<1x128xf32>
    %8 = arith.addf %3, %7 : vector<1x128xf32>
    %c2 = arith.constant 2 : index
    %9 = memref.load %arg1[%c2] : memref<3xf32, #tpu.memory_space<smem>>
    %10 = vector.broadcast %9 : f32 to vector<1x128xf32>
    %11 = arith.addf %8, %10 : vector<1x128xf32>
    %c0_4 = arith.constant 0 : index
    %c0_5 = arith.constant 0 : index
    %12 = vector.load %arg3[%c0_4, %c0_5] : memref<1x128xf32, #tpu.memory_space<vmem>>, vector<1x128xf32>
    tpu.vector_store %arg3[%c0_4, %c0_5], %11 {strides = array<i32>} : memref<1x128xf32, #tpu.memory_space<vmem>>, vector<1x128xf32>,
    return
  }
  func.func @transform_0(%arg0: i32) -> i32 {
    %c0_i32 = arith.constant 0 : i32
    %c0_i32_0 = arith.constant 0 : i32
    return %c0_i32 : i32
  }
  func.func @transform_1(%arg0: i32) -> (i32, i32) {
    %c0_i32 = arith.constant 0 : i32
    %c0_i32_0 = arith.constant 0 : i32
    return %c0_i32, %arg0 : i32, i32
  }
  func.func @transform_2(%arg0: i32) -> (i32, i32) {
    %c0_i32 = arith.constant 0 : i32
    %c0_i32_0 = arith.constant 0 : i32
    return %c0_i32, %arg0 : i32, i32
  }
}

</mosaic_0001>

<llo_original>
// kernel: tpu_custom_call.1
$region0: #{tpu_custom_call.1}
  #allocation0 [shape = 'u32[]', space=smem, size = 0x4, offset = 0x4, fixed_abs, tag = 'smem constant byte address 0x4 - core index']
  #allocation1 [shape = 'u32[72,128]{1,0:T(1,128)}', space=vmem, size = 0x9000, scoped, tag = 'internal scratch']
  %s0 = inlined_call_operand.hbm [shape: f32[3], index: 0, kind: input, shape index: {}]
  %s1 = inlined_call_operand.hbm [shape: f32[2,128], index: 1, kind: input, shape index: {}]
  %s2 = inlined_call_operand.hbm [shape: f32[1,128], index: 2, kind: output, shape index: {}]
  %s3 = sld [smem:[#allocation0]]
  $region26: #{tpu_custom_call.1} parent=0
    _
  %s5 = ssub.s32 1, %s3
  %s6 = scalar_select 0, %s5, %s3
  $region1: #{tpu_custom_call.1} parent=0
    #allocation2 [shape = 'u8[512]{0}', space=smem, size = 0x200, scoped, tag = 'input window, operand 0, single buffered']
    #allocation3 [shape = 's32[1]{0}', space=sflag, size = 0x4, scoped, tag = 'scoped memory for tpu_custom_call.1']
    #allocation4 [shape = 's32[1]{0}', space=sflag, size = 0x4, scoped, tag = 'scoped memory for tpu_custom_call.1']
    #allocation5 [shape = 's32[1]{0}', space=sflag, size = 0x4, scoped, tag = 'scoped memory for tpu_custom_call.1']
    #allocation6 [shape = 'u8[1024]{0}', space=vmem, size = 0x400, scoped, tag = 'input window, operand 1, single buffered']
    #allocation7 [shape = 'u8[512]{0}', space=vmem, size = 0x400, scoped, tag = 'output window, operand 0, single buffered']
    %7 = vsyncpa [#allocation5], 0
    %8 = vsyncpa [#allocation3], 0
    %9 = vsyncpa [#allocation4], 0
    // Predicated region
    $region2: #{tpu_custom_call.1} parent=1 // pred_check
      _
    $region3: #{tpu_custom_call.1} parent=1 // pred_check_branch
      %11 = sbr.rel (0) target = $region5
    $region4: #{tpu_custom_call.1} parent=1 // pred_region
      %13 = vsyncadd [#allocation5], 0
      %s15 = sshll.u32 %s0, 4
      %s16 = int_to_ptr.hbm [resolvable:$true] %s15
      %18 = dma.hbm_to_smem %s16, 16, [#allocation2], [#allocation5]
    $region5: #{tpu_custom_call.1} parent=1 // pred_fallthru
      _
    // Predicated region
    $region6: #{tpu_custom_call.1} parent=1 // pred_check
      _
    $region7: #{tpu_custom_call.1} parent=1 // pred_check_branch
      %20 = sbr.rel (0) target = $region9
    $region8: #{tpu_custom_call.1} parent=1 // pred_region
      %22 = vsyncadd [#allocation3], 0
      %s24 = sshll.u32 %s1, 4
      %s25 = int_to_ptr.hbm [resolvable:$true] %s24
      %s26 = sshll.u32 [#allocation6], 4
      %s27 = int_to_ptr.vmem [resolvable:$true] %s26
      %29 = dma.hbm_to_vmem [thread:$0]  %s25, 32, %s27, [#allocation3]
    $region9: #{tpu_custom_call.1} parent=1 // pred_fallthru
      _
    // Predicated region
    $region10: #{tpu_custom_call.1} parent=1 // pred_check
      _
    $region11: #{tpu_custom_call.1} parent=1 // pred_check_branch
      %31 = sbr.rel (0) target = $region13
    $region12: #{tpu_custom_call.1} parent=1 // pred_region
      %33 = dma.done [#allocation5], 16
    $region13: #{tpu_custom_call.1} parent=1 // pred_fallthru
      _
    // Predicated region
    $region14: #{tpu_custom_call.1} parent=1 // pred_check
      _
    $region15: #{tpu_custom_call.1} parent=1 // pred_check_branch
      %35 = sbr.rel (0) target = $region17
    $region16: #{tpu_custom_call.1} parent=1 // pred_region
      %37 = dma.done [#allocation3], 32
    $region17: #{tpu_custom_call.1} parent=1 // pred_fallthru
      _
    %38 = sfence
    %v39 = vld [vmem:[#allocation6] sm:$0x1]
    %s40 = sld [smem:[#allocation2]]
    %v41 = vstv %s40
    %v42 = vmul.f32 %v39, %v41
    %v43 = vld [vmem:[#allocation6 + $0x1] sm:$0x1]
    %s44 = sld [smem:[#allocation2 + $0x1]]
    %v45 = vstv %s44
    %v46 = vmul.f32 %v43, %v45
    %v47 = vadd.f32 %v42, %v46
    %s48 = sld [smem:[#allocation2 + $0x2]]
    %v49 = vstv %s48
    %v50 = vadd.f32 %v47, %v49
    %51 = vst [vmem:[#allocation7] sm:$0x1] %v50
    // Predicated region
    $region18: #{tpu_custom_call.1} parent=1 // pred_check
      _
    $region19: #{tpu_custom_call.1} parent=1 // pred_check_branch
      %53 = sbr.rel (0) target = $region21
    $region20: #{tpu_custom_call.1} parent=1 // pred_region
      %55 = vsyncadd [#allocation4], 0
      %s57 = sshll.u32 [#allocation7], 4
      %s58 = int_to_ptr.vmem [resolvable:$true] %s57
      %s59 = sshll.u32 %s2, 4
      %s60 = int_to_ptr.hbm [resolvable:$true] %s59
      %62 = dma.vmem_to_hbm [thread:$0]  %s58, 16, %s60, [#allocation4]
    $region21: #{tpu_custom_call.1} parent=1 // pred_fallthru
      _
    // Predicated region
    $region22: #{tpu_custom_call.1} parent=1 // pred_check
      _
    $region23: #{tpu_custom_call.1} parent=1 // pred_check_branch
      %64 = sbr.rel (0) target = $region25
    $region24: #{tpu_custom_call.1} parent=1 // pred_region
      %66 = dma.done [#allocation4], 16
    $region25: #{tpu_custom_call.1} parent=1 // pred_fallthru
      _
    %67 = vsyncpa [#allocation3], 1
    %68 = vsyncpa [#allocation4], 1
    %69 = vsyncpa [#allocation5], 1

</llo_original>
